<compile_context>
chip_gen: v5e
topology: v5e:2x2
jax: 0.10.0
libtpu: 0.0.40
codegen_flags: <defaults>
</compile_context>

<pallas_src>
import jax
import jax.numpy as jnp
from jax.experimental import pallas as pl
from jax.experimental.pallas import tpu as pltpu


# ----------------------------- kernel -----------------------------

def _make_kernel(cinp, has_proj, prestacked, compute_dtype):
    def kernel(*refs):
        if has_proj:
            (x_ref, mask_ref, w1_ref, b1_ref, w2_ref, b2_ref,
             wsc_ref, bsc_ref, o_ref) = refs
        else:
            x_ref, mask_ref, w1_ref, b1_ref, w2_ref, b2_ref, o_ref = refs

        x = x_ref[...]                       # f32 (rows_in, T)
        m_left = mask_ref[0]                 # (1, T): 0 at every segment start
        m_right = mask_ref[1]                # (1, T): 0 at every segment end

        def tap_stack(v):
            # v: (C, T) f32 -> (3C, T) = [v@(j-1); v@j; v@(j+1)] with zero halo
            # at per-batch-segment boundaries (mask kills the rolled wrap-around).
            t = v.shape[1]
            left = pltpu.roll(v, 1, axis=1) * m_left            # out[j] = v[j-1]
            right = pltpu.roll(v, t - 1, axis=1) * m_right      # out[j] = v[j+1]
            return jnp.concatenate([left, v, right], axis=0)

        # ---- conv1 (BN1 scale folded into weights) + shift + ReLU ----
        xs = x if prestacked else tap_stack(x)
        y1 = jnp.dot(w1_ref[...], xs.astype(compute_dtype),
                     preferred_element_type=jnp.float32)
        y1 = jnp.maximum(y1 + b1_ref[...], 0.0)

        # ---- conv2 (BN2 scale folded) + shift ----
        ys = tap_stack(y1)
        y2 = jnp.dot(w2_ref[...], ys.astype(compute_dtype),
                     preferred_element_type=jnp.float32)
        y2 = y2 + b2_ref[...]

        # ---- shortcut ----
        if has_proj:
            # 1x1 strided conv input == the center-tap block of the im2col
            # (rows [cinp, 2*cinp)) when prebuilt, else x itself (stride 1).
            x_c = x[cinp:2 * cinp, :] if prestacked else x
            sc = jnp.dot(wsc_ref[...], x_c.astype(compute_dtype),
                         preferred_element_type=jnp.float32)
            sc = sc + bsc_ref[...]
        else:
            sc = x                           # identity (cinp == coutp)

        # final ReLU; Dropout is identity in eval mode.
        # TODO(synk): train-mode Dropout / batch-statistic BatchNorm not implemented
        # (eval semantics: running-stat BN, dropout = identity).
        o_ref[...] = jnp.maximum(y2 + sc, 0.0).astype(o_ref.dtype)

    return kernel


# ----------------------------- wrapper -----------------------------

def _bn_affine(gamma, beta, mean, var, eps=1e-5):
    scale = gamma / jnp.sqrt(var + eps)
    shift = beta - mean * scale
    return scale.astype(jnp.float32), shift.astype(jnp.float32)


def _round_up(v, m):
    return (v + m - 1) // m * m


def _pick_b_tile(n, lane_per_item, max_lane=8192):
    """Whole batch if the lane slab is small; otherwise the largest divisor of n
    whose lane width is 128-aligned and within the budget (keeps VMEM modest on
    v7x and exposes multiple 'parallel' grid steps for its 2 TensorCores)."""
    if n * lane_per_item <= max_lane:
        return n
    cands = [d for d in range(1, n + 1)
             if n % d == 0 and (d * lane_per_item) % 128 == 0
             and d * lane_per_item <= max_lane]
    return max(cands) if cands else n


def residual_block_1d(x, params, stride=1, compute_dtype=jnp.bfloat16):
    """x: (N, Cin, L) f32 -> (N, Cout, L_out) f32 (eval-mode forward)."""
    n, c_in, length = x.shape
    w1_pt = params["w1_pt"]                       # (Cout, Cin, 3)
    w2_pt = params["w2_pt"]                       # (Cout, Cout, 3)
    c_out = w1_pt.shape[0]
    l_out = (length + 2 - 3) // stride + 1
    has_proj = (stride != 1) or (c_in != c_out)
    prestacked = stride != 1

    cinp = _round_up(c_in, 8)                     # sublane-align channels
    coutp = _round_up(c_out, 8)

    # ---- fold BN scales into conv weights (host-side, once) ----
    s1, t1 = _bn_affine(*params["bn1"])
    s2, t2 = _bn_affine(*params["bn2"])

    w1f = jnp.transpose(w1_pt, (0, 2, 1)) * s1[:, None, None]          # (Cout,3,Cin)
    w1f = jnp.pad(w1f, ((0, coutp - c_out), (0, 0), (0, cinp - c_in)))
    w1f = w1f.reshape(coutp, 3 * cinp).astype(compute_dtype)
    b1 = jnp.pad(t1, (0, coutp - c_out)).reshape(coutp, 1)

    w2f = jnp.transpose(w2_pt, (0, 2, 1)) * s2[:, None, None]          # (Cout,3,Cout)
    w2f = jnp.pad(w2f, ((0, coutp - c_out), (0, 0), (0, coutp - c_out)))
    w2f = w2f.reshape(coutp, 3 * coutp).astype(compute_dtype)
    b2 = jnp.pad(t2, (0, coutp - c_out)).reshape(coutp, 1)

    if has_proj:
        ssc, tsc = _bn_affine(*params["bnsc"])
        wscf = params["wsc_pt"][:, :, 0] * ssc[:, None]                # (Cout,Cin)
        wscf = jnp.pad(wscf, ((0, coutp - c_out), (0, cinp - c_in))).astype(compute_dtype)
        bsc = jnp.pad(tsc, (0, coutp - c_out)).reshape(coutp, 1)

    # ---- arrange input: channels on sublanes, batch*length on lanes ----
    xc = x if cinp == c_in else jnp.pad(x, ((0, 0), (0, cinp - c_in), (0, 0)))
    if prestacked:
        # strided im2col built host-side so the kernel never lane-strides.
        span = (l_out - 1) * stride + 1
        xp = jnp.pad(xc, ((0, 0), (0, 0), (1, 1)))
        taps = [xp[:, :, k:k + span:stride] for k in range(3)]         # (N,Cinp,Lout)
        xin = jnp.stack(taps, axis=0)                                  # (3,N,Cinp,Lout)
        xin = jnp.transpose(xin, (0, 2, 1, 3)).reshape(3 * cinp, n * l_out)
        rows_in = 3 * cinp
    else:
        xin = jnp.transpose(xc, (1, 0, 2)).reshape(cinp, n * length)
        rows_in = cinp

    b_tile = _pick_b_tile(n, l_out)
    grid = (n // b_tile,)
    t_lane = b_tile * l_out                      # (stride==1 => length == l_out)

    # static halo masks: 0 at first / last lane of every length-l_out segment
    pos = jnp.tile(jnp.arange(l_out, dtype=jnp.int32), b_tile)
    masks = jnp.stack([(pos != 0).astype(jnp.float32),
                       (pos != l_out - 1).astype(jnp.float32)]).reshape(2, 1, t_lane)

    kernel = _make_kernel(cinp, has_proj, prestacked, compute_dtype)

    def full(shape):
        return pl.BlockSpec(shape, lambda i, _r=len(shape): (0,) * _r)

    in_specs = [
        pl.BlockSpec((rows_in, t_lane), lambda i: (0, i)),   # x / im2col tile
        full((2, 1, t_lane)),                                # halo masks
        full(w1f.shape), full(b1.shape),
        full(w2f.shape), full(b2.shape),
    ]
    args = [xin, masks, w1f, b1, w2f, b2]
    if has_proj:
        in_specs += [full(wscf.shape), full(bsc.shape)]
        args += [wscf, bsc]

    out = pl.pallas_call(
        kernel,
        out_shape=jax.ShapeDtypeStruct((coutp, n * l_out), x.dtype),
        grid=grid,
        in_specs=in_specs,
        out_specs=pl.BlockSpec((coutp, t_lane), lambda i: (0, i)),
        compiler_params=pltpu.CompilerParams(dimension_semantics=("parallel",)),
    )(*args)

    # layout plumbing back to (N, Cout, L_out); drop channel padding
    return out.reshape(coutp, n, l_out).transpose(1, 0, 2)[:, :c_out, :]


# ------------------- pure-JAX reference (eval-mode PyTorch forward) -------------------

def reference_forward(x, params, stride, has_proj):
    def conv1d(y, w, s, pad):
        return jax.lax.conv_general_dilated(
            y, w, (s,), [(pad, pad)], dimension_numbers=("NCH", "OIH", "NCH"))

    def bn(y, gamma, beta, mean, var, eps=1e-5):
        inv = gamma / jnp.sqrt(var + eps)
        return (y - mean[None, :, None]) * inv[None, :, None] + beta[None, :, None]

    out = jax.nn.relu(bn(conv1d(x, params["w1_pt"], stride, 1), *params["bn1"]))
    out = bn(conv1d(out, params["w2_pt"], 1, 1), *params["bn2"])
    sc = bn(conv1d(x, params["wsc_pt"], stride, 0), *params["bnsc"]) if has_proj else x
    return jax.nn.relu(out + sc)


def make_params(key, c_in, c_out):
    ks = jax.random.split(key, 6)
    w1_pt = jax.random.normal(ks[0], (c_out, c_in, 3), jnp.float32) * 0.2
    w2_pt = jax.random.normal(ks[1], (c_out, c_out, 3), jnp.float32) * 0.2
    wsc_pt = jax.random.normal(ks[2], (c_out, c_in, 1), jnp.float32) * 0.2

    def bn_params(k, c):
        k0, k1, k2, k3 = jax.random.split(k, 4)
        gamma = 1.0 + 0.1 * jax.random.normal(k0, (c,), jnp.float32)
        beta = 0.1 * jax.random.normal(k1, (c,), jnp.float32)
        mean = 0.1 * jax.random.normal(k2, (c,), jnp.float32)
        var = jnp.abs(0.5 + 0.1 * jax.random.normal(k3, (c,), jnp.float32))
        return (gamma, beta, mean, var)

    return {
        "w1_pt": w1_pt, "w2_pt": w2_pt, "wsc_pt": wsc_pt,
        "bn1": bn_params(ks[3], c_out),
        "bn2": bn_params(ks[4], c_out),
        "bnsc": bn_params(ks[5], c_out),
    }


if __name__ == "__main__":
    key = jax.random.PRNGKey(0)

    cases = [
        (2, 4, 8, 64, 1),     # projection shortcut (channel change), stride 1
        (2, 8, 8, 64, 1),     # identity shortcut
        (2, 4, 8, 128, 2),    # strided projection (host-side im2col path)
    ]
    for idx, (n, cin, cout, l, stride) in enumerate(cases):
        kx, kp = jax.random.split(jax.random.fold_in(key, idx))
        x = jax.random.normal(kx, (n, cin, l), jnp.float32)
        params = make_params(kp, cin, cout)
        has_proj = (stride != 1) or (cin != cout)
        ref = reference_forward(x, params, stride, has_proj)

        # exact f32-compute check
        out32 = jax.block_until_ready(
            residual_block_1d(x, params, stride, compute_dtype=jnp.float32))
        assert out32.shape == ref.shape, (out32.shape, ref.shape)
        err32 = float(jnp.max(jnp.abs(out32 - ref)))
        assert jnp.allclose(out32, ref, atol=1e-4, rtol=1e-4), err32

        # bf16 MXU operands / f32 accumulation (relaxed tolerance)
        outbf = jax.block_until_ready(
            residual_block_1d(x, params, stride, compute_dtype=jnp.bfloat16))
        errbf = float(jnp.max(jnp.abs(outbf - ref)))
        assert jnp.allclose(outbf, ref, atol=5e-2, rtol=5e-2), errbf

    print("KERNEL_OK")
</pallas_src>

<mosaic_0001>
module attributes {stable_mosaic.version = 11 : i64} {
  func.func @kernel(%arg0: i32, %arg1: memref<8x128xf32, #tpu.memory_space<vmem>>, %arg2: memref<2x1x128xf32, #tpu.memory_space<vmem>>, %arg3: memref<8x24xf32, #tpu.memory_space<vmem>>, %arg4: memref<8x1xf32, #tpu.memory_space<vmem>>, %arg5: memref<8x24xf32, #tpu.memory_space<vmem>>, %arg6: memref<8x1xf32, #tpu.memory_space<vmem>>, %arg7: memref<8x8xf32, #tpu.memory_space<vmem>>, %arg8: memref<8x1xf32, #tpu.memory_space<vmem>>, %arg9: memref<8x128xf32, #tpu.memory_space<vmem>>) attributes {dimension_semantics = [#tpu.dimension_semantics<parallel>], iteration_bounds = array<i64: 1>, scalar_prefetch = 0 : i64, scratch_operands = 0 : i64, tpu.core_type = #tpu.core_type<tc>, window_params = [{transform_indices = @transform_0, window_bounds = array<i64: 8, 128>}, {pipeline_mode = #tpu.pipeline_mode<synchronous>, transform_indices = @transform_1, window_bounds = array<i64: 2, 1, 128>}, {pipeline_mode = #tpu.pipeline_mode<synchronous>, transform_indices = @transform_2, window_bounds = array<i64: 8, 24>}, {pipeline_mode = #tpu.pipeline_mode<synchronous>, transform_indices = @transform_3, window_bounds = array<i64: 8, 1>}, {pipeline_mode = #tpu.pipeline_mode<synchronous>, transform_indices = @transform_4, window_bounds = array<i64: 8, 24>}, {pipeline_mode = #tpu.pipeline_mode<synchronous>, transform_indices = @transform_5, window_bounds = array<i64: 8, 1>}, {pipeline_mode = #tpu.pipeline_mode<synchronous>, transform_indices = @transform_6, window_bounds = array<i64: 8, 8>}, {pipeline_mode = #tpu.pipeline_mode<synchronous>, transform_indices = @transform_7, window_bounds = array<i64: 8, 1>}, {transform_indices = @transform_8, window_bounds = array<i64: 8, 128>}]} {
    %c0 = arith.constant 0 : index
    %c0_0 = arith.constant 0 : index
    %0 = vector.load %arg1[%c0, %c0_0] : memref<8x128xf32, #tpu.memory_space<vmem>>, vector<8x128xf32>
    %c0_1 = arith.constant 0 : index
    %c0_2 = arith.constant 0 : index
    %c0_3 = arith.constant 0 : index
    %1 = vector.load %arg2[%c0_1, %c0_2, %c0_3] : memref<2x1x128xf32, #tpu.memory_space<vmem>>, vector<1x1x128xf32>
    %2 = vector.shape_cast %1 : vector<1x1x128xf32> to vector<1x128xf32>
    %c1 = arith.constant 1 : index
    %c0_4 = arith.constant 0 : index
    %c0_5 = arith.constant 0 : index
    %3 = vector.load %arg2[%c1, %c0_4, %c0_5] : memref<2x1x128xf32, #tpu.memory_space<vmem>>, vector<1x1x128xf32>
    %4 = vector.shape_cast %3 : vector<1x1x128xf32> to vector<1x128xf32>
    %c1_i32 = arith.constant 1 : i32
    %5 = tpu.dynamic_rotate %0 by %c1_i32 dim 1 : vector<8x128xf32>, i32 -> vector<8x128xf32>
    %6 = vector.broadcast %2 : vector<1x128xf32> to vector<8x128xf32>
    %7 = arith.mulf %5, %6 : vector<8x128xf32>
    %c127_i32 = arith.constant 127 : i32
    %8 = tpu.dynamic_rotate %0 by %c127_i32 dim 1 : vector<8x128xf32>, i32 -> vector<8x128xf32>
    %9 = vector.broadcast %4 : vector<1x128xf32> to vector<8x128xf32>
    %10 = arith.mulf %8, %9 : vector<8x128xf32>
    %11 = tpu.concatenate %7, %0, %10 in 0 : vector<8x128xf32>, vector<8x128xf32>, vector<8x128xf32> -> vector<24x128xf32>
    %c0_6 = arith.constant 0 : index
    %c0_7 = arith.constant 0 : index
    %12 = vector.load %arg3[%c0_6, %c0_7] : memref<8x24xf32, #tpu.memory_space<vmem>>, vector<8x24xf32>
    %cst = arith.constant dense<0.000000e+00> : vector<8x128xf32>
    %13 = tpu.matmul %12, %11, %cst {dimension_numbers = #tpu.dot_dimension_numbers<[1], [0], [0], [1], [0, 0, 1, 1], [], []>} : vector<8x24xf32>, vector<24x128xf32>, vector<8x128xf32> -> vector<8x128xf32>
    %c0_8 = arith.constant 0 : index
    %c0_9 = arith.constant 0 : index
    %14 = vector.load %arg4[%c0_8, %c0_9] : memref<8x1xf32, #tpu.memory_space<vmem>>, vector<8x1xf32>
    %15 = vector.broadcast %14 : vector<8x1xf32> to vector<8x128xf32>
    %16 = arith.addf %13, %15 : vector<8x128xf32>
    %cst_10 = arith.constant 0.000000e+00 : f32
    %17 = vector.broadcast %cst_10 : f32 to vector<8x128xf32>
    %18 = arith.maximumf %16, %17 : vector<8x128xf32>
    %c1_i32_11 = arith.constant 1 : i32
    %19 = tpu.dynamic_rotate %18 by %c1_i32_11 dim 1 : vector<8x128xf32>, i32 -> vector<8x128xf32>
    %20 = vector.broadcast %2 : vector<1x128xf32> to vector<8x128xf32>
    %21 = arith.mulf %19, %20 : vector<8x128xf32>
    %c127_i32_12 = arith.constant 127 : i32
    %22 = tpu.dynamic_rotate %18 by %c127_i32_12 dim 1 : vector<8x128xf32>, i32 -> vector<8x128xf32>
    %23 = vector.broadcast %4 : vector<1x128xf32> to vector<8x128xf32>
    %24 = arith.mulf %22, %23 : vector<8x128xf32>
    %25 = tpu.concatenate %21, %18, %24 in 0 : vector<8x128xf32>, vector<8x128xf32>, vector<8x128xf32> -> vector<24x128xf32>
    %c0_13 = arith.constant 0 : index
    %c0_14 = arith.constant 0 : index
    %26 = vector.load %arg5[%c0_13, %c0_14] : memref<8x24xf32, #tpu.memory_space<vmem>>, vector<8x24xf32>
    %cst_15 = arith.constant dense<0.000000e+00> : vector<8x128xf32>
    %27 = tpu.matmul %26, %25, %cst_15 {dimension_numbers = #tpu.dot_dimension_numbers<[1], [0], [0], [1], [0, 0, 1, 1], [], []>} : vector<8x24xf32>, vector<24x128xf32>, vector<8x128xf32> -> vector<8x128xf32>
    %c0_16 = arith.constant 0 : index
    %c0_17 = arith.constant 0 : index
    %28 = vector.load %arg6[%c0_16, %c0_17] : memref<8x1xf32, #tpu.memory_space<vmem>>, vector<8x1xf32>
    %29 = vector.broadcast %28 : vector<8x1xf32> to vector<8x128xf32>
    %30 = arith.addf %27, %29 : vector<8x128xf32>
    %c0_18 = arith.constant 0 : index
    %c0_19 = arith.constant 0 : index
    %31 = vector.load %arg7[%c0_18, %c0_19] : memref<8x8xf32, #tpu.memory_space<vmem>>, vector<8x8xf32>
    %cst_20 = arith.constant dense<0.000000e+00> : vector<8x128xf32>
    %32 = tpu.matmul %31, %0, %cst_20 {dimension_numbers = #tpu.dot_dimension_numbers<[1], [0], [0], [1], [0, 0, 1, 1], [], []>} : vector<8x8xf32>, vector<8x128xf32>, vector<8x128xf32> -> vector<8x128xf32>
    %c0_21 = arith.constant 0 : index
    %c0_22 = arith.constant 0 : index
    %33 = vector.load %arg8[%c0_21, %c0_22] : memref<8x1xf32, #tpu.memory_space<vmem>>, vector<8x1xf32>
    %34 = vector.broadcast %33 : vector<8x1xf32> to vector<8x128xf32>
    %35 = arith.addf %32, %34 : vector<8x128xf32>
    %36 = arith.addf %30, %35 : vector<8x128xf32>
    %cst_23 = arith.constant 0.000000e+00 : f32
    %37 = vector.broadcast %cst_23 : f32 to vector<8x128xf32>
    %38 = arith.maximumf %36, %37 : vector<8x128xf32>
    %c0_24 = arith.constant 0 : index
    %c0_25 = arith.constant 0 : index
    %39 = vector.load %arg9[%c0_24, %c0_25] : memref<8x128xf32, #tpu.memory_space<vmem>>, vector<8x128xf32>
    tpu.vector_store %arg9[%c0_24, %c0_25], %38 {strides = array<i32>} : memref<8x128xf32, #tpu.memory_space<vmem>>, vector<8x128xf32>,
    return
  }
  func.func @transform_0(%arg0: i32) -> (i32, i32) {
    %c0_i32 = arith.constant 0 : i32
    %c0_i32_0 = arith.constant 0 : i32
    return %c0_i32, %arg0 : i32, i32
  }
  func.func @transform_1(%arg0: i32) -> (i32, i32, i32) {
    %c0_i32 = arith.constant 0 : i32
    %c0_i32_0 = arith.constant 0 : i32
    %c0_i32_1 = arith.constant 0 : i32
    %c0_i32_2 = arith.constant 0 : i32
    return %c0_i32, %c0_i32_0, %c0_i32_1 : i32, i32, i32
  }
  func.func @transform_2(%arg0: i32) -> (i32, i32) {
    %c0_i32 = arith.constant 0 : i32
    %c0_i32_0 = arith.constant 0 : i32
    %c0_i32_1 = arith.constant 0 : i32
    return %c0_i32, %c0_i32_0 : i32, i32
  }
  func.func @transform_3(%arg0: i32) -> (i32, i32) {
    %c0_i32 = arith.constant 0 : i32
    %c0_i32_0 = arith.constant 0 : i32
    %c0_i32_1 = arith.constant 0 : i32
    return %c0_i32, %c0_i32_0 : i32, i32
  }
  func.func @transform_4(%arg0: i32) -> (i32, i32) {
    %c0_i32 = arith.constant 0 : i32
    %c0_i32_0 = arith.constant 0 : i32
    %c0_i32_1 = arith.constant 0 : i32
    return %c0_i32, %c0_i32_0 : i32, i32
  }
  func.func @transform_5(%arg0: i32) -> (i32, i32) {
    %c0_i32 = arith.constant 0 : i32
    %c0_i32_0 = arith.constant 0 : i32
    %c0_i32_1 = arith.constant 0 : i32
    return %c0_i32, %c0_i32_0 : i32, i32
  }
  func.func @transform_6(%arg0: i32) -> (i32, i32) {
    %c0_i32 = arith.constant 0 : i32
    %c0_i32_0 = arith.constant 0 : i32
    %c0_i32_1 = arith.constant 0 : i32
    return %c0_i32, %c0_i32_0 : i32, i32
  }
  func.func @transform_7(%arg0: i32) -> (i32, i32) {
    %c0_i32 = arith.constant 0 : i32
    %c0_i32_0 = arith.constant 0 : i32
    %c0_i32_1 = arith.constant 0 : i32
    return %c0_i32, %c0_i32_0 : i32, i32
  }
  func.func @transform_8(%arg0: i32) -> (i32, i32) {
    %c0_i32 = arith.constant 0 : i32
    %c0_i32_0 = arith.constant 0 : i32
    return %c0_i32, %arg0 : i32, i32
  }
}

</mosaic_0001>

<llo_original>
// kernel: tpu_custom_call.1
$region0: #{tpu_custom_call.1}
  #allocation0 [shape = 'u32[]', space=smem, size = 0x4, offset = 0x4, fixed_abs, tag = 'smem constant byte address 0x4 - core index']
  #allocation1 [shape = 'u32[72,128]{1,0:T(1,128)}', space=vmem, size = 0x9000, scoped, tag = 'internal scratch']
  %s0 = inlined_call_operand.vmem [shape: f32[8,128], index: 0, kind: input, shape index: {}]
  %s1 = inlined_call_operand.hbm [shape: f32[2,1,128], index: 1, kind: input, shape index: {}]
  %s2 = inlined_call_operand.vmem [shape: f32[8,24], index: 2, kind: input, shape index: {}]
  %s3 = inlined_call_operand.vmem [shape: f32[8,1], index: 3, kind: input, shape index: {}]
  %s4 = inlined_call_operand.vmem [shape: f32[8,24], index: 4, kind: input, shape index: {}]
  %s5 = inlined_call_operand.vmem [shape: f32[8,1], index: 5, kind: input, shape index: {}]
  %s6 = inlined_call_operand.hbm [shape: f32[8,8], index: 6, kind: input, shape index: {}]
  %s7 = inlined_call_operand.vmem [shape: f32[8,1], index: 7, kind: input, shape index: {}]
  %s8 = inlined_call_operand.hbm [shape: f32[8,128], index: 8, kind: output, shape index: {}]
  %s9 = sld [smem:[#allocation0]]
  $region50: #{tpu_custom_call.1} parent=0
    _
  %s11 = ssub.s32 1, %s9
  %s12 = scalar_select 0, %s11, %s9
  $region1: #{tpu_custom_call.1} parent=0
    #allocation2 [shape = 'u8[1024]{0}', space=vmem, size = 0x400, scoped, tag = 'input window, operand 1, single buffered']
    #allocation3 [shape = 's32[1]{0}', space=sflag, size = 0x4, scoped, tag = 'scoped memory for tpu_custom_call.1']
    #allocation4 [shape = 's32[1]{0}', space=sflag, size = 0x4, scoped, tag = 'scoped memory for tpu_custom_call.1']
    #allocation5 [shape = 'u8[4096]{0}', space=vmem, size = 0x1000, scoped, tag = 'input window, operand 6, single buffered']
    #allocation6 [shape = 's32[1]{0}', space=sflag, size = 0x4, scoped, tag = 'scoped memory for tpu_custom_call.1']
    #allocation7 [shape = 'u8[4096]{0}', space=vmem, size = 0x1000, scoped, tag = 'output window, operand 0, single buffered']
    %13 = vsyncpa [#allocation3], 0
    %14 = vsyncpa [#allocation6], 0
    %15 = vsyncpa [#allocation4], 0
    // Predicated region
    $region2: #{tpu_custom_call.1} parent=1 // pred_check
      _
    $region3: #{tpu_custom_call.1} parent=1 // pred_check_branch
      %17 = sbr.rel (0) target = $region5
    $region4: #{tpu_custom_call.1} parent=1 // pred_region
      _
    $region5: #{tpu_custom_call.1} parent=1 // pred_fallthru
      _
    // Predicated region
    $region6: #{tpu_custom_call.1} parent=1 // pred_check
      _
    $region7: #{tpu_custom_call.1} parent=1 // pred_check_branch
      %19 = sbr.rel (0) target = $region9
    $region8: #{tpu_custom_call.1} parent=1 // pred_region
      %21 = vsyncadd [#allocation3], 0
      %s22 = sshll.u32 %s1, 4
      %s23 = int_to_ptr.hbm [resolvable:$true] %s22
      %s24 = sshll.u32 [#allocation2], 4
      %s25 = int_to_ptr.vmem [resolvable:$true] %s24
      %30 = dma.hbm_to_vmem [thread:$0]  %s23, 32, %s25, [#allocation3], 16, 16, 1
    $region9: #{tpu_custom_call.1} parent=1 // pred_fallthru
      _
    // Predicated region
    $region10: #{tpu_custom_call.1} parent=1 // pred_check
      _
    $region11: #{tpu_custom_call.1} parent=1 // pred_check_branch
      %32 = sbr.rel (0) target = $region13
    $region12: #{tpu_custom_call.1} parent=1 // pred_region
      _
    $region13: #{tpu_custom_call.1} parent=1 // pred_fallthru
      _
    // Predicated region
    $region14: #{tpu_custom_call.1} parent=1 // pred_check
      _
    $region15: #{tpu_custom_call.1} parent=1 // pred_check_branch
      %34 = sbr.rel (0) target = $region17
    $region16: #{tpu_custom_call.1} parent=1 // pred_region
      _
    $region17: #{tpu_custom_call.1} parent=1 // pred_fallthru
      _
    // Predicated region
    $region18: #{tpu_custom_call.1} parent=1 // pred_check
      _
    $region19: #{tpu_custom_call.1} parent=1 // pred_check_branch
      %36 = sbr.rel (0) target = $region21
    $region20: #{tpu_custom_call.1} parent=1 // pred_region
      _
    $region21: #{tpu_custom_call.1} parent=1 // pred_fallthru
      _
    // Predicated region
    $region22: #{tpu_custom_call.1} parent=1 // pred_check
      _
    $region23: #{tpu_custom_call.1} parent=1 // pred_check_branch
      %38 = sbr.rel (0) target = $region25
    $region24: #{tpu_custom_call.1} parent=1 // pred_region
      _
    $region25: #{tpu_custom_call.1} parent=1 // pred_fallthru
      _
    // Predicated region
    $region26: #{tpu_custom_call.1} parent=1 // pred_check
      _
    $region27: #{tpu_custom_call.1} parent=1 // pred_check_branch
      %40 = sbr.rel (0) target = $region29
    $region28: #{tpu_custom_call.1} parent=1 // pred_region
      %42 = vsyncadd [#allocation6], 0
      %s44 = sshll.u32 %s6, 4
      %s45 = int_to_ptr.hbm [resolvable:$true] %s44
      %s46 = sshll.u32 [#allocation5], 4
      %s47 = int_to_ptr.vmem [resolvable:$true] %s46
      %49 = dma.hbm_to_vmem [thread:$0]  %s45, 128, %s47, [#allocation6]
    $region29: #{tpu_custom_call.1} parent=1 // pred_fallthru
      _
    // Predicated region
    $region30: #{tpu_custom_call.1} parent=1 // pred_check
      _
    $region31: #{tpu_custom_call.1} parent=1 // pred_check_branch
      %51 = sbr.rel (0) target = $region33
    $region32: #{tpu_custom_call.1} parent=1 // pred_region
      _
    $region33: #{tpu_custom_call.1} parent=1 // pred_fallthru
      _
    // Predicated region
    $region34: #{tpu_custom_call.1} parent=1 // pred_check
      _
    $region35: #{tpu_custom_call.1} parent=1 // pred_check_branch
      %53 = sbr.rel (0) target = $region37
    $region36: #{tpu_custom_call.1} parent=1 // pred_region
      %55 = dma.done [#allocation3], 32
    $region37: #{tpu_custom_call.1} parent=1 // pred_fallthru
      _
    // Predicated region
    $region38: #{tpu_custom_call.1} parent=1 // pred_check
      _
    $region39: #{tpu_custom_call.1} parent=1 // pred_check_branch
      %57 = sbr.rel (0) target = $region41
    $region40: #{tpu_custom_call.1} parent=1 // pred_region
      %59 = dma.done [#allocation6], 128
    $region41: #{tpu_custom_call.1} parent=1 // pred_fallthru
      _
    %v60 = vld [vmem:[%s0] sm:$0xff]
    %v61 = vld [vmem:[#allocation2] sm:$0x1]
    %s62 = scalar_lea.vmem [#allocation2], 1
    %v63 = vld [vmem:[%s62] sm:$0x1]
    %64 = vrot.lane.b32.xlu0 %v60, 1
    %v65 = vpop.permute.xlu0 %64
    %v67 = vperm.slane %v61, 0
    %v69 = vmul.f32 %v65, %v67
    %70 = vrot.lane.b32.xlu0 %v60, 127
    %v71 = vpop.permute.xlu0 %70
    %v73 = vperm.slane %v63, 0
    %v75 = vmul.f32 %v71, %v73
    %v76 = vld [vmem:[%s2] sm:$0xff]
    %v77 = vld [vmem:[%s3] sm:$0xff]
    %79 = vset.pattern.permute.xlu0 0
    %80 = vperm.xlu0 %79, %v77
    %v81 = vpop.permute.xlu0 %80
    %vm83 = vcmask 195584
    %v85 = vsel %vm83, %v76, 0
    %87 = vmatpush.msra.mxu0 0.0
    %88 = vmatpush.msra.mxu0 0.0
    %89 = vmatpush.msra.mxu0 0.0
    %90 = vmatpush.msra.mxu0 0.0
    %91 = vmatpush.msra.mxu0 0.0
    %92 = vmatpush.msra.mxu0 0.0
    %93 = vmatpush.msra.mxu0 0.0
    %94 = vmatpush.msra.mxu0 0.0
    %95 = vmatpush.msra.mxu0 0.0
    %96 = vmatpush.msra.mxu0 0.0
    %97 = vmatpush.msra.mxu0 0.0
    %98 = vmatpush.msra.mxu0 0.0
    %99 = vmatpush.msra.mxu0 0.0
    %100 = vmatpush.msra.mxu0 %v75
    %101 = vmatpush.msra.mxu0 %v60
    %102 = vmatpush.msra.mxu0 %v69
    %103 = vmatmul.f32.gmra.mxu0 %v85
    %v104 = vpop.f32.mrf.mxu0
    %v105 = vadd.f32 %v81, %v104
    %106 = vdwg.mxu0
    %v107 = vmax.f32 %v105, 0.0
    %108 = vrot.lane.b32.xlu0 %v107, 1
    %v109 = vpop.permute.xlu0 %108
    %v110 = vmul.f32 %v109, %v67
    %111 = vrot.lane.b32.xlu0 %v107, 127
    %v112 = vpop.permute.xlu0 %111
    %v113 = vmul.f32 %v112, %v73
    %v114 = vld [vmem:[%s4] sm:$0xff]
    %v115 = vld [vmem:[%s5] sm:$0xff]
    %117 = vset.pattern.permute.xlu0 0
    %118 = vperm.xlu0 %117, %v115
    %v119 = vpop.permute.xlu0 %118
    %v122 = vsel %vm83, %v114, 0
    %124 = vmatpush.msra.mxu0 0.0
    %125 = vmatpush.msra.mxu0 0.0
    %126 = vmatpush.msra.mxu0 0.0
    %127 = vmatpush.msra.mxu0 0.0
    %128 = vmatpush.msra.mxu0 0.0
    %129 = vmatpush.msra.mxu0 0.0
    %130 = vmatpush.msra.mxu0 0.0
    %131 = vmatpush.msra.mxu0 0.0
    %132 = vmatpush.msra.mxu0 0.0
    %133 = vmatpush.msra.mxu0 0.0
    %134 = vmatpush.msra.mxu0 0.0
    %135 = vmatpush.msra.mxu0 0.0
    %136 = vmatpush.msra.mxu0 0.0
    %137 = vmatpush.msra.mxu0 %v113
    %138 = vmatpush.msra.mxu0 %v107
    %139 = vmatpush.msra.mxu0 %v110
    %140 = vmatmul.f32.gmra.mxu0 %v122
    %v141 = vpop.f32.mrf.mxu0
    %v142 = vadd.f32 %v119, %v141
    %143 = vdwg.mxu0
    %v144 = vld [vmem:[#allocation5] sm:$0xff]
    %v145 = vld [vmem:[%s7] sm:$0xff]
    %147 = vset.pattern.permute.xlu0 0
    %148 = vperm.xlu0 %147, %v145
    %v149 = vpop.permute.xlu0 %148
    %vm151 = vcmask 64512
    %v153 = vsel %vm151, %v144, 0
    %155 = vmatpush.msra.mxu0 0.0
    %156 = vmatpush.msra.mxu0 0.0
    %157 = vmatpush.msra.mxu0 0.0
    %158 = vmatpush.msra.mxu0 0.0
    %159 = vmatpush.msra.mxu0 0.0
    %160 = vmatpush.msra.mxu0 0.0
    %161 = vmatpush.msra.mxu0 0.0
    %162 = vmatpush.msra.mxu0 0.0
    %163 = vmatpush.msra.mxu0 0.0
    %164 = vmatpush.msra.mxu0 0.0
    %165 = vmatpush.msra.mxu0 0.0
    %166 = vmatpush.msra.mxu0 0.0
    %167 = vmatpush.msra.mxu0 0.0
    %168 = vmatpush.msra.mxu0 0.0
    %169 = vmatpush.msra.mxu0 0.0
    %170 = vmatpush.msra.mxu0 %v60
    %171 = vmatmul.f32.gmra.mxu0 %v153
    %v172 = vpop.f32.mrf.mxu0
    %v173 = vadd.f32 %v149, %v172
    %174 = vdwg.mxu0
    %v175 = vadd.f32 %v142, %v173
    %v176 = vmax.f32 %v175, 0.0
    %177 = vst [vmem:[#allocation7] sm:$0xff] %v176
    // Predicated region
    $region42: #{tpu_custom_call.1} parent=1 // pred_check
      _
    $region43: #{tpu_custom_call.1} parent=1 // pred_check_branch
      %179 = sbr.rel (0) target = $region45
    $region44: #{tpu_custom_call.1} parent=1 // pred_region
      %181 = vsyncadd [#allocation4], 0
      %s183 = sshll.u32 [#allocation7], 4
      %s184 = int_to_ptr.vmem [resolvable:$true] %s183
      %s185 = sshll.u32 %s8, 4
      %s186 = int_to_ptr.hbm [resolvable:$true] %s185
      %188 = dma.vmem_to_hbm [thread:$0]  %s184, 128, %s186, [#allocation4]
    $region45: #{tpu_custom_call.1} parent=1 // pred_fallthru
      _
    // Predicated region
    $region46: #{tpu_custom_call.1} parent=1 // pred_check
      _
    $region47: #{tpu_custom_call.1} parent=1 // pred_check_branch
      %190 = sbr.rel (0) target = $region49
    $region48: #{tpu_custom_call.1} parent=1 // pred_region
      %192 = dma.done [#allocation4], 128
    $region49: #{tpu_custom_call.1} parent=1 // pred_fallthru
      _
    %193 = vsyncpa [#allocation3], 1
    %194 = vsyncpa [#allocation6], 1
    %195 = vsyncpa [#allocation4], 1

</llo_original>
